<compile_context>
chip_gen: v5e
topology: v5e:2x2
jax: 0.10.0
libtpu: 0.0.40
codegen_flags: <defaults>
</compile_context>

<pallas_src>
import jax
import jax.numpy as jnp
from jax.experimental import pallas as pl
from jax.experimental.pallas import tpu as pltpu


_BUDGET_CACHE = None          # (per-block byte budget, scoped-VMEM request)
_TRY_BUFFERED_INPUT = True    # request pl.Buffered(3) input pipelining when available


# ---------------------------------------------------------------------------
# helpers
# ---------------------------------------------------------------------------
def _prod(xs):
    r = 1
    for v in xs:
        r *= int(v)
    return r


def _round_up(v, m):
    return ((v + m - 1) // m) * m


def _sublane_align(dtype):
    # packed sublane factor: 8 for 32-bit, 16 for bf16, 32 for int8
    return max(8, 32 // max(1, jnp.dtype(dtype).itemsize))


def _budgets():
    """(per-block byte budget, scoped-VMEM request) selected per TPU generation."""
    global _BUDGET_CACHE
    if _BUDGET_CACHE is None:
        vmem = 0
        try:
            vmem = int(getattr(pltpu.get_tpu_info(), "vmem_capacity_bytes", 0) or 0)
        except Exception:
            vmem = 0
        if vmem >= 96 * 1024 * 1024:          # v5e / v6e: 128 MiB physical VMEM
            _BUDGET_CACHE = (4 * 1024 * 1024, 64 * 1024 * 1024)
        else:                                  # v7x (64 MiB / TC) or unknown: stay safe
            _BUDGET_CACHE = (2 * 1024 * 1024, 32 * 1024 * 1024)
    return _BUDGET_CACHE


def _effective_perm(ndim, dims):
    """Exactly the permutation the PyTorch module would apply."""
    if not dims:
        perm = tuple(reversed(range(ndim)))
    else:
        perm = tuple(int(d) for d in dims)
    if ndim == len(perm) + 1:
        perm = tuple([0] + [d + 1 for d in perm])   # ONNX implicit batch dim
    perm = tuple(d % ndim for d in perm)            # normalize negative dims
    assert sorted(perm) == list(range(ndim)), f"bad dims {dims} for rank {ndim}"
    return perm


def _coalesce(shape, perm):
    """Drop size-1 axes and merge axes that stay adjacent & in order under perm."""
    ndim = len(shape)
    keep = [i for i in range(ndim) if shape[i] != 1]
    if not keep:
        keep = [ndim - 1]
    keep_set = set(keep)
    in_rank = {ax: i for i, ax in enumerate(keep)}
    groups = []
    for ax in perm:
        if ax not in keep_set:
            continue
        if groups and in_rank[ax] == in_rank[groups[-1][-1]] + 1:
            groups[-1].append(ax)
        else:
            groups.append([ax])
    order = sorted(range(len(groups)), key=lambda g: in_rank[groups[g][0]])
    new_shape = tuple(_prod([shape[a] for a in groups[g]]) for g in order)
    pos = {g: i for i, g in enumerate(order)}
    new_perm = tuple(pos[g] for g in range(len(groups)))
    return new_shape, new_perm


# ---------------------------------------------------------------------------
# kernels
# ---------------------------------------------------------------------------
def _relabel_kernel(x_ref, o_ref):
    # Blocked (>1) axes keep their relative order between input and output, and the
    # last two (sublane/lane) block dims are identical on both sides, so the tile's
    # row-major element order is unchanged: a leading-dims reshape is the whole op.
    o_ref[...] = x_ref[...].reshape(o_ref.shape)


def _swap_minor_kernel(x_ref, o_ref):
    # Transpose of the last two (sublane/lane) axes of the VMEM tile, batched over
    # any folded leading block axes.  Lowers to the supported minor-dim transpose.
    x = x_ref[...]
    tm, tn = x.shape[-2], x.shape[-1]
    lead = _prod(x.shape[:-2])
    if lead == 1:
        y = jnp.swapaxes(x.reshape(tm, tn), 0, 1)
    else:
        y = jnp.swapaxes(x.reshape(lead, tm, tn), 1, 2)
    o_ref[...] = y.reshape(o_ref.shape)


# ---------------------------------------------------------------------------
# pallas_call wiring shared by both pass types
# ---------------------------------------------------------------------------
def _compiler_params(n_grid):
    return pltpu.CompilerParams(
        dimension_semantics=("parallel",) * n_grid,   # megacore sharding on v7x
        vmem_limit_bytes=_budgets()[1],
    )


def _launch(kernel, x, in_blk, out_blk, perm, out_shape):
    """Grid over output blocks (output-sequential writes); input blocks via inv-perm."""
    global _TRY_BUFFERED_INPUT
    r = len(perm)
    inv = [0] * r
    for k, a in enumerate(perm):
        inv[a] = k

    # Drop grid dims that have a single block: megacore then only sees real parallel
    # work and per-step grid overhead goes down.
    n_blocks = [int(pl.cdiv(out_shape[k], out_blk[k])) for k in range(r)]
    grid_axes = [k for k in range(r) if n_blocks[k] > 1] or [r - 1]
    grid = tuple(n_blocks[k] for k in grid_axes)
    pos = {k: i for i, k in enumerate(grid_axes)}

    def out_index_map(*g):
        return tuple(g[pos[k]] if k in pos else 0 for k in range(r))

    def in_index_map(*g):
        ob = out_index_map(*g)
        return tuple(ob[inv[j]] for j in range(r))

    nbytes = _prod(out_shape) * jnp.dtype(x.dtype).itemsize
    cost = pl.CostEstimate(flops=0, transcendentals=0, bytes_accessed=2 * nbytes)

    def build(in_spec):
        return pl.pallas_call(
            kernel,
            out_shape=jax.ShapeDtypeStruct(out_shape, x.dtype),
            grid=grid,
            in_specs=[in_spec],
            out_specs=pl.BlockSpec(tuple(out_blk), out_index_map),
            compiler_params=_compiler_params(len(grid)),
            cost_estimate=cost,
        )

    if _TRY_BUFFERED_INPUT and hasattr(pl, "Buffered"):
        # Compute is ~zero: the pipeline is DMA-in vs DMA-out.  A 3rd input buffer
        # hides strided-read latency / per-step bubbles for one extra block of VMEM.
        try:
            spec = pl.BlockSpec(tuple(in_blk), in_index_map,
                                pipeline_mode=pl.Buffered(3))
            return build(spec)(x)
        except Exception:
            _TRY_BUFFERED_INPUT = False   # unsupported here: fall back once, for good
    return build(pl.BlockSpec(tuple(in_blk), in_index_map))(x)


# ---------------------------------------------------------------------------
# the two pass types
# ---------------------------------------------------------------------------
def _relabel_pass(x, S, P):
    """Permutations keeping the last (lane) axis last: all movement via the grid; the
    kernel body is a pure copy (the tile's row-major order is unchanged)."""
    r = len(S)
    itemsize = jnp.dtype(x.dtype).itemsize
    sub = _sublane_align(x.dtype)
    block_bytes, _ = _budgets()
    budget = max(1, block_bytes // itemsize)            # elements per (padded) block

    lane = S[-1]
    if lane % 128 == 0 and lane >= 256:
        # Split the lane into (A, L): the two new axes stay adjacent & in order on both
        # input and output, so the relabel invariant holds.  L is a multiple of 128
        # (lane-dense stores); L only grows while A stays >= the sublane pack, which
        # keeps the tiles sublane-dense (no 8x/16x/32x VMEM padding, unmasked vst).
        L = 128
        while lane % (2 * L) == 0 and (lane // (2 * L)) >= sub and 2 * L <= budget:
            L *= 2
        A = lane // L
        tn = L
        rows = max(1, budget // tn)
        bA = min(A, max(sub, (rows // sub) * sub))       # multiple of sub, or full A
        S2 = tuple(S[:-1]) + (A, L)
    else:
        # Fallback (odd / small lane): size-1 dummy second-minor axis on both sides.
        # Tiles are sublane-sparse but legal for any lane extent.
        max_tn = max(128, (budget // sub // 128) * 128)
        tn = lane if lane <= max_tn else max_tn
        bA = 1
        S2 = tuple(S[:-1]) + (1, lane)
    P2 = tuple(P[:-1]) + (r - 1, r)
    x2 = x.reshape(S2)
    r2 = r + 1

    blk = [1] * r2
    blk[r2 - 1] = tn
    blk[r2 - 2] = bA

    # Fold output-major sources into the block, innermost first, while the blocked axes
    # keep their relative order between input and output (so the pure-reshape copy in
    # the kernel stays a no-op relabel).  The budget accounts for (sub, 128) padding.
    rem = max(1, budget // (_round_up(bA, sub) * _round_up(tn, 128)))
    prev_in_axis = r2 - 2
    for j in range(r - 2, -1, -1):
        if rem <= 1:
            break
        a = P2[j]
        if a >= prev_in_axis:                            # order would break: stop
            break
        blk[a] = min(S2[a], rem)
        rem //= max(1, blk[a])
        prev_in_axis = a

    out_blk = tuple(blk[a] for a in P2)
    out_shape = tuple(S2[a] for a in P2)
    y = _launch(_relabel_kernel, x2, blk, out_blk, P2, out_shape)
    return y.reshape(tuple(S[a] for a in P))


def _minor_tile(dtype, block_bytes):
    """Largest power-of-two tile (>=256, <=2048) whose square fits the block budget,
    so narrow dtypes (bf16/int8) keep ~1-2 MiB tiles instead of 256-512 KiB ones."""
    itemsize = jnp.dtype(dtype).itemsize
    t = 256
    while (2 * t) * (2 * t) * itemsize <= block_bytes and 2 * t <= 2048:
        t *= 2
    return t


def _minor_swap_pass(x, S, P):
    """Permutations swapping the last two axes (majors arbitrary): tiled in-kernel swap."""
    r = len(S)
    itemsize = jnp.dtype(x.dtype).itemsize
    sub = _sublane_align(x.dtype)
    block_bytes, _ = _budgets()
    budget = max(1, block_bytes // itemsize)

    tile = _minor_tile(x.dtype, block_bytes)             # dtype / generation scaled
    tm = S[r - 2] if S[r - 2] <= tile else tile
    tn = S[r - 1] if S[r - 1] <= tile else tile
    blk = [1] * r
    blk[r - 2] = tm
    blk[r - 1] = tn

    # Budget accounts for (sublane, lane) layout padding of both input & output tiles.
    pad = max(_round_up(tm, sub) * _round_up(tn, 128),
              _round_up(tn, sub) * _round_up(tm, 128))
    rem = max(1, budget // pad)
    # Fold order-preserving (fixed-point) major axes into the block as a batch dim,
    # innermost first, so small-minor tensors (e.g. NCHW 16x16) still move big blocks.
    for j in range(r - 3, -1, -1):
        if rem <= 1:
            break
        if P[j] == j:
            blk[j] = min(S[j], rem)
            rem //= max(1, blk[j])

    out_blk = tuple(blk[a] for a in P)
    out_shape = tuple(S[a] for a in P)
    # TODO(synk): when one swapped minor is < 128 (e.g. NCHW<->NHWC with small C) the
    # output stores are still lane-masked; a lane-dense merged output view needs an
    # in-kernel (tm, C)->(1, tm*C) relayout whose Mosaic lowering must be verified first.
    return _launch(_swap_minor_kernel, x, blk, out_blk, P, out_shape)


# ---------------------------------------------------------------------------
# dispatcher
# ---------------------------------------------------------------------------
def _transpose_coalesced(x, S, P):
    r = len(S)
    if P[-1] == r - 1:                                 # lane preserved
        return _relabel_pass(x, S, P)
    if P[-1] == r - 2 and P[-2] == r - 1:              # minor swap (+ arbitrary majors)
        return _minor_swap_pass(x, S, P)

    # General permutation: two mem-bound passes.
    #   pass 1 (relabel): reorder axes keeping the lane last, into
    #                     (suffix-after-lane, prefix-before-lane, lane)
    #   pass 2 (2-D swap): block-transpose the two merged groups.
    # TODO(synk): a single-pass version needs in-kernel sublane<->major transposes,
    # which Mosaic does not reliably lower.
    k1 = P.index(r - 1)
    interm = tuple(P[k1 + 1:]) + tuple(P[:k1]) + (r - 1,)
    interm_shape = tuple(S[a] for a in interm)
    if interm == tuple(range(r)):
        x1 = x
    else:
        Sc, Pc = _coalesce(S, interm)
        if Pc == tuple(range(len(Sc))):
            x1 = x.reshape(interm_shape)
        else:
            x1 = _relabel_pass(x.reshape(Sc), Sc, Pc).reshape(interm_shape)
    n_u = r - 1 - k1
    d0 = _prod(interm_shape[:n_u])
    d1 = _prod(interm_shape[n_u:])
    y = _minor_swap_pass(x1.reshape(d0, d1), (d0, d1), (1, 0))
    return y.reshape(tuple(S[a] for a in P))


def pallas_transpose(x, dims=None):
    """Pallas-TPU equivalent of onnx2pytorch Transpose.forward."""
    perm = _effective_perm(x.ndim, dims)
    out_shape = tuple(x.shape[p] for p in perm)
    if perm == tuple(range(x.ndim)):
        return x                                       # identity permute: free
    S, P = _coalesce(x.shape, perm)
    if len(S) < 2 or P == tuple(range(len(S))):
        return x.reshape(out_shape)                    # only size-1 axes moved: reshape
    y = _transpose_coalesced(x.reshape(S), S, P)
    return y.reshape(out_shape)


# ---------------------------------------------------------------------------
# self-test
# ---------------------------------------------------------------------------
if __name__ == "__main__":
    key = jax.random.PRNGKey(0)
    tests = [
        ("2d_default_reverse",       (128, 256),      None,          jnp.float32),
        ("2d_tiled_partial_blocks",  (1152, 640),     None,          jnp.float32),
        ("nchw_swap_hw",             (2, 4, 16, 16),  (0, 1, 3, 2),  jnp.float32),
        ("nchw_swap_nc",             (2, 4, 16, 16),  (1, 0, 2, 3),  jnp.float32),
        ("nchw_to_nhwc",             (2, 4, 8, 16),   (0, 2, 3, 1),  jnp.float32),
        ("implicit_batch_dim",       (2, 8, 16),      (1, 0),        jnp.float32),
        ("full_reverse_4d",          (2, 4, 8, 16),   None,          jnp.float32),
        ("identity",                 (2, 4, 8, 16),   (0, 1, 2, 3),  jnp.float32),
        ("negative_dims_odd",        (3, 5, 7),       (-2, -3, -1),  jnp.float32),
        ("relabel_lane_split_bf16",  (2, 4, 2048),    (1, 0, 2),     jnp.bfloat16),
        ("minor_swap_bf16",          (256, 384),      None,          jnp.bfloat16),
        ("relabel_lane_split_int8",  (4, 8, 2, 256),  (0, 2, 1, 3),  jnp.int8),
    ]
    keys = jax.random.split(key, len(tests))

    ok = True
    for (name, shape, dims, dtype), k in zip(tests, keys):
        if dtype == jnp.int8:
            x = jax.random.randint(k, shape, -128, 127, dtype=jnp.int32).astype(jnp.int8)
        else:
            x = jax.random.normal(k, shape, jnp.float32).astype(dtype)
        got = jax.block_until_ready(pallas_transpose(x, dims))
        want = jnp.transpose(x, _effective_perm(x.ndim, dims))
        if (got.shape != want.shape or got.dtype != want.dtype
                or not bool(jnp.array_equal(got, want))):
            ok = False
            print(f"MISMATCH in {name}: got {got.shape} {got.dtype}, "
                  f"want {want.shape} {want.dtype}")

    if ok:
        print("KERNEL_OK")
</pallas_src>

<mosaic_0001>
module attributes {stable_mosaic.version = 11 : i64} {
  func.func @_swap_minor_kernel(%arg0: i32, %arg1: memref<128x256xf32, #tpu.memory_space<vmem>>, %arg2: memref<256x128xf32, #tpu.memory_space<vmem>>) attributes {dimension_semantics = [#tpu.dimension_semantics<parallel>], iteration_bounds = array<i64: 1>, scalar_prefetch = 0 : i64, scratch_operands = 0 : i64, tpu.core_type = #tpu.core_type<tc>, window_params = [{transform_indices = @transform_0, window_bounds = array<i64: 128, 256>}, {transform_indices = @transform_1, window_bounds = array<i64: 256, 128>}]} {
    %c0 = arith.constant 0 : index
    %c0_0 = arith.constant 0 : index
    %0 = vector.load %arg1[%c0, %c0_0] : memref<128x256xf32, #tpu.memory_space<vmem>>, vector<128x256xf32>
    %1 = tpu.transpose %0, [1, 0] : vector<128x256xf32> -> vector<256x128xf32>
    %c0_1 = arith.constant 0 : index
    %c0_2 = arith.constant 0 : index
    %2 = vector.load %arg2[%c0_1, %c0_2] : memref<256x128xf32, #tpu.memory_space<vmem>>, vector<256x128xf32>
    tpu.vector_store %arg2[%c0_1, %c0_2], %1 {strides = array<i32>} : memref<256x128xf32, #tpu.memory_space<vmem>>, vector<256x128xf32>,
    return
  }
  func.func @transform_0(%arg0: i32) -> (i32, i32) {
    %c0_i32 = arith.constant 0 : i32
    %c0_i32_0 = arith.constant 0 : i32
    return %arg0, %c0_i32 : i32, i32
  }
  func.func @transform_1(%arg0: i32) -> (i32, i32) {
    %c0_i32 = arith.constant 0 : i32
    %c0_i32_0 = arith.constant 0 : i32
    return %c0_i32, %arg0 : i32, i32
  }
}

</mosaic_0001>

<llo_original>
// kernel: tpu_custom_call.1
$region0: #{tpu_custom_call.1}
  #allocation0 [shape = 'u32[]', space=smem, size = 0x4, offset = 0x4, fixed_abs, tag = 'smem constant byte address 0x4 - core index']
  #allocation1 [shape = 'u32[72,128]{1,0:T(1,128)}', space=vmem, size = 0x9000, scoped, tag = 'internal scratch']
  %s0 = inlined_call_operand.hbm [shape: f32[128,256], index: 0, kind: input, shape index: {}]
  %s1 = inlined_call_operand.hbm [shape: f32[256,128], index: 1, kind: output, shape index: {}]
  %s2 = sld [smem:[#allocation0]]
  $region18: #{tpu_custom_call.1} parent=0
    _
  %s4 = ssub.s32 1, %s2
  %s5 = scalar_select 0, %s4, %s2
  $region1: #{tpu_custom_call.1} parent=0
    #allocation2 [shape = 'u8[131072]{0}', space=vmem, size = 0x20000, scoped, tag = 'input window, operand 0, single buffered']
    #allocation3 [shape = 's32[1]{0}', space=sflag, size = 0x4, scoped, tag = 'scoped memory for tpu_custom_call.1']
    #allocation4 [shape = 's32[1]{0}', space=sflag, size = 0x4, scoped, tag = 'scoped memory for tpu_custom_call.1']
    #allocation5 [shape = 'u8[131072]{0}', space=vmem, size = 0x20000, scoped, tag = 'output window, operand 0, single buffered']
    %6 = vsyncpa [#allocation3], 0
    %7 = vsyncpa [#allocation4], 0
    // Predicated region
    $region2: #{tpu_custom_call.1} parent=1 // pred_check
      _
    $region3: #{tpu_custom_call.1} parent=1 // pred_check_branch
      %9 = sbr.rel (0) target = $region5
    $region4: #{tpu_custom_call.1} parent=1 // pred_region
      %11 = vsyncadd [#allocation3], 0
      %s12 = sshll.u32 %s0, 4
      %s13 = int_to_ptr.hbm [resolvable:$true] %s12
      %s14 = sshll.u32 [#allocation2], 4
      %s15 = int_to_ptr.vmem [resolvable:$true] %s14
      %20 = dma.hbm_to_vmem [thread:$0]  %s13, 4096, %s15, [#allocation3], 256, 256, 16
    $region5: #{tpu_custom_call.1} parent=1 // pred_fallthru
      _
    // Predicated region
    $region6: #{tpu_custom_call.1} parent=1 // pred_check
      _
    $region7: #{tpu_custom_call.1} parent=1 // pred_check_branch
      %22 = sbr.rel (0) target = $region9
    $region8: #{tpu_custom_call.1} parent=1 // pred_region
      %24 = dma.done [#allocation3], 4096
    $region9: #{tpu_custom_call.1} parent=1 // pred_fallthru
      _
    %v25 = vld [vmem:[#allocation2] sm:$0xff]
    %v26 = vld [vmem:[#allocation2 + $0x8] sm:$0xff]
    %v27 = vld [vmem:[#allocation2 + $0x10] sm:$0xff]
    %v28 = vld [vmem:[#allocation2 + $0x18] sm:$0xff]
    %v29 = vld [vmem:[#allocation2 + $0x20] sm:$0xff]
    %v30 = vld [vmem:[#allocation2 + $0x28] sm:$0xff]
    %v31 = vld [vmem:[#allocation2 + $0x30] sm:$0xff]
    %v32 = vld [vmem:[#allocation2 + $0x38] sm:$0xff]
    %v33 = vld [vmem:[#allocation2 + $0x40] sm:$0xff]
    %v34 = vld [vmem:[#allocation2 + $0x48] sm:$0xff]
    %v35 = vld [vmem:[#allocation2 + $0x50] sm:$0xff]
    %v36 = vld [vmem:[#allocation2 + $0x58] sm:$0xff]
    %v37 = vld [vmem:[#allocation2 + $0x60] sm:$0xff]
    %v38 = vld [vmem:[#allocation2 + $0x68] sm:$0xff]
    %v39 = vld [vmem:[#allocation2 + $0x70] sm:$0xff]
    %v40 = vld [vmem:[#allocation2 + $0x78] sm:$0xff]
    %v41 = vld [vmem:[#allocation2 + $0x80] sm:$0xff]
    %v42 = vld [vmem:[#allocation2 + $0x88] sm:$0xff]
    %v43 = vld [vmem:[#allocation2 + $0x90] sm:$0xff]
    %v44 = vld [vmem:[#allocation2 + $0x98] sm:$0xff]
    %v45 = vld [vmem:[#allocation2 + $0xa0] sm:$0xff]
    %v46 = vld [vmem:[#allocation2 + $0xa8] sm:$0xff]
    %v47 = vld [vmem:[#allocation2 + $0xb0] sm:$0xff]
    %v48 = vld [vmem:[#allocation2 + $0xb8] sm:$0xff]
    %v49 = vld [vmem:[#allocation2 + $0xc0] sm:$0xff]
    %v50 = vld [vmem:[#allocation2 + $0xc8] sm:$0xff]
    %v51 = vld [vmem:[#allocation2 + $0xd0] sm:$0xff]
    %v52 = vld [vmem:[#allocation2 + $0xd8] sm:$0xff]
    %v53 = vld [vmem:[#allocation2 + $0xe0] sm:$0xff]
    %v54 = vld [vmem:[#allocation2 + $0xe8] sm:$0xff]
    %v55 = vld [vmem:[#allocation2 + $0xf0] sm:$0xff]
    %v56 = vld [vmem:[#allocation2 + $0xf8] sm:$0xff]
    %57 = vxpose.xlu0.b32.start [1/16] %v25, 128
    %58 = vxpose.xlu0.b32.cont [2/16] %v27, 128
    %59 = vxpose.xlu0.b32.cont [3/16] %v29, 128
    %60 = vxpose.xlu0.b32.cont [4/16] %v31, 128
    %61 = vxpose.xlu0.b32.cont [5/16] %v33, 128
    %62 = vxpose.xlu0.b32.cont [6/16] %v35, 128
    %63 = vxpose.xlu0.b32.cont [7/16] %v37, 128
    %64 = vxpose.xlu0.b32.cont [8/16] %v39, 128
    %65 = vxpose.xlu0.b32.cont [9/16] %v41, 128
    %66 = vxpose.xlu0.b32.cont [10/16] %v43, 128
    %67 = vxpose.xlu0.b32.cont [11/16] %v45, 128
    %68 = vxpose.xlu0.b32.cont [12/16] %v47, 128
    %69 = vxpose.xlu0.b32.cont [13/16] %v49, 128
    %70 = vxpose.xlu0.b32.cont [14/16] %v51, 128
    %71 = vxpose.xlu0.b32.cont [15/16] %v53, 128
    %72 = vxpose.xlu0.b32.end [16/16] %v55, 128
    %v73 = vpop.trf.xlu0
    %v74 = vpop.trf.xlu0
    %v75 = vpop.trf.xlu0
    %v76 = vpop.trf.xlu0
    %v77 = vpop.trf.xlu0
    %v78 = vpop.trf.xlu0
    %v79 = vpop.trf.xlu0
    %v80 = vpop.trf.xlu0
    %v81 = vpop.trf.xlu0
    %v82 = vpop.trf.xlu0
    %v83 = vpop.trf.xlu0
    %v84 = vpop.trf.xlu0
    %v85 = vpop.trf.xlu0
    %v86 = vpop.trf.xlu0
    %v87 = vpop.trf.xlu0
    %v88 = vpop.trf.xlu0
    %89 = vxpose.xlu0.b32.start [1/16] %v26, 128
    %90 = vxpose.xlu0.b32.cont [2/16] %v28, 128
    %91 = vxpose.xlu0.b32.cont [3/16] %v30, 128
    %92 = vxpose.xlu0.b32.cont [4/16] %v32, 128
    %93 = vxpose.xlu0.b32.cont [5/16] %v34, 128
    %94 = vxpose.xlu0.b32.cont [6/16] %v36, 128
    %95 = vxpose.xlu0.b32.cont [7/16] %v38, 128
    %96 = vxpose.xlu0.b32.cont [8/16] %v40, 128
    %97 = vxpose.xlu0.b32.cont [9/16] %v42, 128
    %98 = vxpose.xlu0.b32.cont [10/16] %v44, 128
    %99 = vxpose.xlu0.b32.cont [11/16] %v46, 128
    %100 = vxpose.xlu0.b32.cont [12/16] %v48, 128
    %101 = vxpose.xlu0.b32.cont [13/16] %v50, 128
    %102 = vxpose.xlu0.b32.cont [14/16] %v52, 128
    %103 = vxpose.xlu0.b32.cont [15/16] %v54, 128
    %104 = vxpose.xlu0.b32.end [16/16] %v56, 128
    %v105 = vpop.trf.xlu0
    %v106 = vpop.trf.xlu0
    %v107 = vpop.trf.xlu0
    %v108 = vpop.trf.xlu0
    %v109 = vpop.trf.xlu0
    %v110 = vpop.trf.xlu0
    %v111 = vpop.trf.xlu0
    %v112 = vpop.trf.xlu0
    %v113 = vpop.trf.xlu0
    %v114 = vpop.trf.xlu0
    %v115 = vpop.trf.xlu0
    %v116 = vpop.trf.xlu0
    %v117 = vpop.trf.xlu0
    %v118 = vpop.trf.xlu0
    %v119 = vpop.trf.xlu0
    %v120 = vpop.trf.xlu0
    %121 = vst [vmem:[#allocation5] sm:$0xff] %v73
    %122 = vst [vmem:[#allocation5 + $0x8] sm:$0xff] %v74
    %123 = vst [vmem:[#allocation5 + $0x10] sm:$0xff] %v75
    %124 = vst [vmem:[#allocation5 + $0x18] sm:$0xff] %v76
    %125 = vst [vmem:[#allocation5 + $0x20] sm:$0xff] %v77
    %126 = vst [vmem:[#allocation5 + $0x28] sm:$0xff] %v78
    %127 = vst [vmem:[#allocation5 + $0x30] sm:$0xff] %v79
    %128 = vst [vmem:[#allocation5 + $0x38] sm:$0xff] %v80
    %129 = vst [vmem:[#allocation5 + $0x40] sm:$0xff] %v81
    %130 = vst [vmem:[#allocation5 + $0x48] sm:$0xff] %v82
    %131 = vst [vmem:[#allocation5 + $0x50] sm:$0xff] %v83
    %132 = vst [vmem:[#allocation5 + $0x58] sm:$0xff] %v84
    %133 = vst [vmem:[#allocation5 + $0x60] sm:$0xff] %v85
    %134 = vst [vmem:[#allocation5 + $0x68] sm:$0xff] %v86
    %135 = vst [vmem:[#allocation5 + $0x70] sm:$0xff] %v87
    %136 = vst [vmem:[#allocation5 + $0x78] sm:$0xff] %v88
    %137 = vst [vmem:[#allocation5 + $0x80] sm:$0xff] %v105
    %138 = vst [vmem:[#allocation5 + $0x88] sm:$0xff] %v106
    %139 = vst [vmem:[#allocation5 + $0x90] sm:$0xff] %v107
    %140 = vst [vmem:[#allocation5 + $0x98] sm:$0xff] %v108
    %141 = vst [vmem:[#allocation5 + $0xa0] sm:$0xff] %v109
    %142 = vst [vmem:[#allocation5 + $0xa8] sm:$0xff] %v110
    %143 = vst [vmem:[#allocation5 + $0xb0] sm:$0xff] %v111
    %144 = vst [vmem:[#allocation5 + $0xb8] sm:$0xff] %v112
    %145 = vst [vmem:[#allocation5 + $0xc0] sm:$0xff] %v113
    %146 = vst [vmem:[#allocation5 + $0xc8] sm:$0xff] %v114
    %147 = vst [vmem:[#allocation5 + $0xd0] sm:$0xff] %v115
    %148 = vst [vmem:[#allocation5 + $0xd8] sm:$0xff] %v116
    %149 = vst [vmem:[#allocation5 + $0xe0] sm:$0xff] %v117
    %150 = vst [vmem:[#allocation5 + $0xe8] sm:$0xff] %v118
    %151 = vst [vmem:[#allocation5 + $0xf0] sm:$0xff] %v119
    %152 = vst [vmem:[#allocation5 + $0xf8] sm:$0xff] %v120
    // Predicated region
    $region10: #{tpu_custom_call.1} parent=1 // pred_check
      _
    $region11: #{tpu_custom_call.1} parent=1 // pred_check_branch
      %154 = sbr.rel (0) target = $region13
    $region12: #{tpu_custom_call.1} parent=1 // pred_region
      %156 = vsyncadd [#allocation4], 0
      %s157 = sshll.u32 [#allocation5], 4
      %s158 = int_to_ptr.vmem [resolvable:$true] %s157
      %s159 = sshll.u32 %s1, 4
      %s160 = int_to_ptr.hbm [resolvable:$true] %s159
      %165 = dma.vmem_to_hbm [thread:$0]  %s158, 4096, %s160, [#allocation4], 128, 128, 8
    $region13: #{tpu_custom_call.1} parent=1 // pred_fallthru
      _
    // Predicated region
    $region14: #{tpu_custom_call.1} parent=1 // pred_check
      _
    $region15: #{tpu_custom_call.1} parent=1 // pred_check_branch
      %167 = sbr.rel (0) target = $region17
    $region16: #{tpu_custom_call.1} parent=1 // pred_region
      %169 = dma.done [#allocation4], 4096
    $region17: #{tpu_custom_call.1} parent=1 // pred_fallthru
      _
    %170 = vsyncpa [#allocation3], 1
    %171 = vsyncpa [#allocation4], 1

</llo_original>
